<compile_context>
chip_gen: v5e
topology: v5e:2x2
jax: 0.10.0
libtpu: 0.0.40
codegen_flags: <defaults>
</compile_context>

<pallas_src>
import functools

import jax
import jax.numpy as jnp
from jax.experimental import pallas as pl
from jax.experimental.pallas import tpu as pltpu


def _gap_head_kernel(x_ref, gamma_ref, beta_ref, o_ref, *, pool_k, eps, compute_dtype):
    # x_ref:     (TL, C)            a tile of rows (row = one (b, l) position)
    # gamma_ref: (1, C), beta_ref:  (1, C)   -- already in compute_dtype (cast hoisted)
    # o_ref:     (TL // pool_k, C)
    x = x_ref[...].astype(jnp.float32)                       # (TL, C)
    tl, c = x.shape
    inv_c = 1.0 / c

    # Two-pass LayerNorm statistics over the channel axis (biased variance, like torch).
    mean = jnp.sum(x, axis=-1, keepdims=True) * inv_c        # (TL, 1)
    xc = x - mean
    var = jnp.sum(xc * xc, axis=-1, keepdims=True) * inv_c   # (TL, 1)
    rstd = jax.lax.rsqrt(var + eps)

    # Normalized rows (no affine yet).  For bf16 inputs, the remaining elementwise work
    # runs in bf16 (stats above stay f32) to raise VALU throughput on v6e/v7x.
    z = (xc * rstd).astype(compute_dtype)                    # (TL, C)

    # AvgPool1d(kernel=pool_k, stride=pool_k) along rows; TL is a multiple of 8*pool_k,
    # so the reshape splits on whole sublane packs.
    l_out = tl // pool_k
    pooled = jnp.mean(z.reshape(l_out, pool_k, c), axis=1)   # (TL//pool_k, C)

    # Deferred affine: gamma * mean(z) + beta == mean(gamma * z + beta).
    o_ref[...] = (pooled * gamma_ref[0] + beta_ref[0]).astype(o_ref.dtype)


def _choose_tile_rows(n_rows, pool_k, row_bytes, target_block_bytes):
    """Pick the input row-tile size TL.

    TL is a multiple of 8*pool_k so both the input block (TL rows) and the output block
    (TL/pool_k rows) are multiples of the 8-row sublane pack.  The grid is cdiv(n_rows,
    TL); the masked edge block is harmless because rows are independent and n_rows is a
    multiple of pool_k.  When more than one tile exists, the step count is forced >= 2
    and even so the "parallel" grid axis pipelines DMA and shards across both v7x cores.
    """
    unit = 8 * pool_k
    if n_rows <= unit:
        return n_rows  # single full-array block: always a legal block shape
    n_units = -(-n_rows // unit)
    unit_bytes = max(1, row_bytes * unit)
    budget_units = max(1, int(target_block_bytes) // unit_bytes)
    steps = max(2, -(-n_units // budget_units))
    if steps % 2:
        steps += 1  # even split across the two v7x TensorCores
    tile_units = max(1, -(-n_units // steps))
    return tile_units * unit


def gap_head(x, gamma, beta, *, pool_k=8, eps=1e-5, target_block_bytes=4 << 20):
    """x: (B, L, C) -> (B, L // pool_k, C). Matches nn.LayerNorm(C) + nn.AvgPool1d(pool_k)."""
    B, L, C = x.shape
    L_out = L // pool_k
    assert L_out > 0, "sequence length must be at least pool_k"
    if L_out * pool_k != L:
        # torch.nn.AvgPool1d(kernel, stride=kernel) silently drops the remainder.
        x = x[:, : L_out * pool_k, :]
        L = L_out * pool_k

    R = B * L                       # total rows; pool windows never straddle a batch edge
    R_out = B * L_out

    compute_dtype = jnp.bfloat16 if x.dtype == jnp.bfloat16 else jnp.float32

    x_flat = x.reshape(R, C)        # free (contiguous) reshape in the wrapper
    gamma2d = gamma.astype(compute_dtype).reshape(1, C)   # cast hoisted out of the body
    beta2d = beta.astype(compute_dtype).reshape(1, C)

    itemsize = jnp.dtype(x.dtype).itemsize
    row_bytes = C * itemsize
    TL = _choose_tile_rows(R, pool_k, row_bytes, target_block_bytes)
    TL_out = TL // pool_k
    grid = (pl.cdiv(R, TL),)

    # VMEM budget: 2x double-buffered input block + 2x output block + ~4 f32-sized
    # in-kernel temporaries + headroom; clamped to [32 MiB, 64 MiB] (v7x physical VMEM).
    in_block_bytes = TL * C * itemsize
    out_block_bytes = TL_out * C * itemsize
    vmem_needed = 2 * in_block_bytes + 2 * out_block_bytes + 4 * TL * C * 4 + (2 << 20)
    vmem_limit = int(min(64 << 20, max(32 << 20, vmem_needed)))

    kernel = functools.partial(
        _gap_head_kernel, pool_k=pool_k, eps=eps, compute_dtype=compute_dtype
    )

    out_flat = pl.pallas_call(
        kernel,
        out_shape=jax.ShapeDtypeStruct((R_out, C), x.dtype),
        grid_spec=pltpu.PrefetchScalarGridSpec(
            num_scalar_prefetch=0,
            grid=grid,
            in_specs=[
                pl.BlockSpec((TL, C), lambda i: (i, 0)),
                pl.BlockSpec((1, C), lambda i: (0, 0)),
                pl.BlockSpec((1, C), lambda i: (0, 0)),
            ],
            out_specs=pl.BlockSpec((TL_out, C), lambda i: (i, 0)),
        ),
        compiler_params=pltpu.CompilerParams(
            dimension_semantics=("parallel",),
            vmem_limit_bytes=vmem_limit,
        ),
    )(x_flat, gamma2d, beta2d)

    return out_flat.reshape(B, L_out, C)


def gap_head_ref(x, gamma, beta, *, pool_k=8, eps=1e-5):
    """Pure-JAX reference mirroring the PyTorch module."""
    B, L, C = x.shape
    L_out = L // pool_k
    xf = x[:, : L_out * pool_k, :].astype(jnp.float32)
    mean = jnp.mean(xf, axis=-1, keepdims=True)
    var = jnp.mean((xf - mean) ** 2, axis=-1, keepdims=True)
    y = (xf - mean) * jax.lax.rsqrt(var + eps) * gamma + beta
    pooled = jnp.mean(y.reshape(B, L_out, pool_k, C), axis=2)
    return pooled.astype(x.dtype)


if __name__ == "__main__":
    POOL_K = 8
    key = jax.random.PRNGKey(0)
    kx, kg, kb = jax.random.split(key, 3)

    # Module defaults: dim (=C) = 48, kernel = 8. Small test shape: B=2, L=16 -> L_out=2.
    B, L, C = 2, 16, 48
    x = jax.random.normal(kx, (B, L, C), dtype=jnp.float32)
    gamma = 1.0 + 0.1 * jax.random.normal(kg, (C,), dtype=jnp.float32)
    beta = 0.1 * jax.random.normal(kb, (C,), dtype=jnp.float32)

    out = jax.block_until_ready(gap_head(x, gamma, beta, pool_k=POOL_K))
    ref = gap_head_ref(x, gamma, beta, pool_k=POOL_K)
    assert out.shape == (B, L // POOL_K, C), out.shape
    assert jnp.allclose(out, ref, atol=1e-4, rtol=1e-5), float(jnp.max(jnp.abs(out - ref)))

    # Multi-tile path with a masked edge block: R = 2*280 = 560 rows is not a multiple of
    # the 64-row tile unit, and the small budget forces >1 grid step.
    B2, L2 = 2, 280
    x2 = jax.random.normal(kx, (B2, L2, C), dtype=jnp.float32)
    out2 = jax.block_until_ready(
        gap_head(x2, gamma, beta, pool_k=POOL_K, target_block_bytes=64 * 1024)
    )
    ref2 = gap_head_ref(x2, gamma, beta, pool_k=POOL_K)
    assert out2.shape == (B2, L2 // POOL_K, C), out2.shape
    assert jnp.allclose(out2, ref2, atol=1e-4, rtol=1e-5), float(jnp.max(jnp.abs(out2 - ref2)))

    # bf16 input path: stats in f32, elementwise normalize/pool/affine in bf16.
    B3, L3 = 2, 64
    x3 = jax.random.normal(kx, (B3, L3, C), dtype=jnp.float32).astype(jnp.bfloat16)
    out3 = jax.block_until_ready(gap_head(x3, gamma, beta, pool_k=POOL_K))
    ref3 = gap_head_ref(x3, gamma, beta, pool_k=POOL_K)
    assert out3.shape == (B3, L3 // POOL_K, C), out3.shape
    assert jnp.allclose(
        out3.astype(jnp.float32), ref3.astype(jnp.float32), atol=5e-2, rtol=5e-2
    ), float(jnp.max(jnp.abs(out3.astype(jnp.float32) - ref3.astype(jnp.float32))))

    print("KERNEL_OK")
</pallas_src>

<mosaic_0001>
module attributes {stable_mosaic.version = 11 : i64} {
  func.func @_gap_head_kernel(%arg0: i32, %arg1: memref<32x48xf32, #tpu.memory_space<vmem>>, %arg2: memref<1x48xf32, #tpu.memory_space<vmem>>, %arg3: memref<1x48xf32, #tpu.memory_space<vmem>>, %arg4: memref<4x48xf32, #tpu.memory_space<vmem>>) attributes {dimension_semantics = [#tpu.dimension_semantics<parallel>], iteration_bounds = array<i64: 1>, scalar_prefetch = 0 : i64, scratch_operands = 0 : i64, tpu.core_type = #tpu.core_type<tc>, window_params = [{transform_indices = @transform_0, window_bounds = array<i64: 32, 48>}, {pipeline_mode = #tpu.pipeline_mode<synchronous>, transform_indices = @transform_1, window_bounds = array<i64: 1, 48>}, {pipeline_mode = #tpu.pipeline_mode<synchronous>, transform_indices = @transform_2, window_bounds = array<i64: 1, 48>}, {transform_indices = @transform_3, window_bounds = array<i64: 4, 48>}]} {
    %c0 = arith.constant 0 : index
    %c0_0 = arith.constant 0 : index
    %0 = vector.load %arg1[%c0, %c0_0] : memref<32x48xf32, #tpu.memory_space<vmem>>, vector<32x48xf32>
    %cst = arith.constant dense<0.000000e+00> : vector<32xf32>
    %1 = vector.multi_reduction <add>, %0, %cst [1] : vector<32x48xf32> to vector<32xf32>
    %2 = vector.shape_cast %1 : vector<32xf32> to vector<32x1xf32>
    %cst_1 = arith.constant 0.020833334 : f32
    %3 = vector.broadcast %cst_1 : f32 to vector<32x1xf32>
    %4 = arith.mulf %2, %3 : vector<32x1xf32>
    %5 = vector.broadcast %4 : vector<32x1xf32> to vector<32x48xf32>
    %6 = arith.subf %0, %5 : vector<32x48xf32>
    %7 = arith.mulf %6, %6 : vector<32x48xf32>
    %cst_2 = arith.constant dense<0.000000e+00> : vector<32xf32>
    %8 = vector.multi_reduction <add>, %7, %cst_2 [1] : vector<32x48xf32> to vector<32xf32>
    %9 = vector.shape_cast %8 : vector<32xf32> to vector<32x1xf32>
    %cst_3 = arith.constant 0.020833334 : f32
    %10 = vector.broadcast %cst_3 : f32 to vector<32x1xf32>
    %11 = arith.mulf %9, %10 : vector<32x1xf32>
    %cst_4 = arith.constant 9.99999974E-6 : f32
    %12 = vector.broadcast %cst_4 : f32 to vector<32x1xf32>
    %13 = arith.addf %11, %12 : vector<32x1xf32>
    %14 = math.rsqrt %13 : vector<32x1xf32>
    %15 = vector.broadcast %14 : vector<32x1xf32> to vector<32x48xf32>
    %16 = arith.mulf %6, %15 : vector<32x48xf32>
    %17 = vector.shape_cast %16 : vector<32x48xf32> to vector<4x8x48xf32>
    %cst_5 = arith.constant dense<0.000000e+00> : vector<4x48xf32>
    %18 = vector.multi_reduction <add>, %17, %cst_5 [1] : vector<4x8x48xf32> to vector<4x48xf32>
    %cst_6 = arith.constant 8.000000e+00 : f32
    %19 = vector.broadcast %cst_6 : f32 to vector<4x48xf32>
    %20 = arith.divf %18, %19 : vector<4x48xf32>
    %c0_7 = arith.constant 0 : index
    %c0_8 = arith.constant 0 : index
    %21 = vector.load %arg2[%c0_7, %c0_8] : memref<1x48xf32, #tpu.memory_space<vmem>>, vector<1x48xf32>
    %22 = vector.shape_cast %21 : vector<1x48xf32> to vector<48xf32>
    %23 = vector.shape_cast %22 : vector<48xf32> to vector<1x48xf32>
    %24 = vector.broadcast %23 : vector<1x48xf32> to vector<4x48xf32>
    %25 = arith.mulf %20, %24 : vector<4x48xf32>
    %c0_9 = arith.constant 0 : index
    %c0_10 = arith.constant 0 : index
    %26 = vector.load %arg3[%c0_9, %c0_10] : memref<1x48xf32, #tpu.memory_space<vmem>>, vector<1x48xf32>
    %27 = vector.shape_cast %26 : vector<1x48xf32> to vector<48xf32>
    %28 = vector.shape_cast %27 : vector<48xf32> to vector<1x48xf32>
    %29 = vector.broadcast %28 : vector<1x48xf32> to vector<4x48xf32>
    %30 = arith.addf %25, %29 : vector<4x48xf32>
    %c0_11 = arith.constant 0 : index
    %c0_12 = arith.constant 0 : index
    %31 = vector.load %arg4[%c0_11, %c0_12] : memref<4x48xf32, #tpu.memory_space<vmem>>, vector<4x48xf32>
    tpu.vector_store %arg4[%c0_11, %c0_12], %30 {strides = array<i32>} : memref<4x48xf32, #tpu.memory_space<vmem>>, vector<4x48xf32>,
    return
  }
  func.func @transform_0(%arg0: i32) -> (i32, i32) {
    %c0_i32 = arith.constant 0 : i32
    %c0_i32_0 = arith.constant 0 : i32
    return %arg0, %c0_i32 : i32, i32
  }
  func.func @transform_1(%arg0: i32) -> (i32, i32) {
    %c0_i32 = arith.constant 0 : i32
    %c0_i32_0 = arith.constant 0 : i32
    %c0_i32_1 = arith.constant 0 : i32
    return %c0_i32, %c0_i32_0 : i32, i32
  }
  func.func @transform_2(%arg0: i32) -> (i32, i32) {
    %c0_i32 = arith.constant 0 : i32
    %c0_i32_0 = arith.constant 0 : i32
    %c0_i32_1 = arith.constant 0 : i32
    return %c0_i32, %c0_i32_0 : i32, i32
  }
  func.func @transform_3(%arg0: i32) -> (i32, i32) {
    %c0_i32 = arith.constant 0 : i32
    %c0_i32_0 = arith.constant 0 : i32
    return %arg0, %c0_i32 : i32, i32
  }
}

</mosaic_0001>

<llo_original>
// kernel: tpu_custom_call.1
$region0: #{tpu_custom_call.1}
  #allocation0 [shape = 'u32[]', space=smem, size = 0x4, offset = 0x4, fixed_abs, tag = 'smem constant byte address 0x4 - core index']
  #allocation1 [shape = 'u32[72,128]{1,0:T(1,128)}', space=vmem, size = 0x9000, scoped, tag = 'internal scratch']
  %s0 = inlined_call_operand.hbm [shape: f32[32,48], index: 0, kind: input, shape index: {}]
  %s1 = inlined_call_operand.hbm [shape: f32[1,48], index: 1, kind: input, shape index: {}]
  %s2 = inlined_call_operand.vmem [shape: f32[1,48], index: 2, kind: input, shape index: {}]
  %s3 = inlined_call_operand.hbm [shape: f32[4,48], index: 3, kind: output, shape index: {}]
  %s4 = sld [smem:[#allocation0]]
  $region30: #{tpu_custom_call.1} parent=0
    _
  %s6 = ssub.s32 1, %s4
  %s7 = scalar_select 0, %s6, %s4
  $region1: #{tpu_custom_call.1} parent=0
    #allocation2 [shape = 'u8[16384]{0}', space=vmem, size = 0x4000, scoped, tag = 'input window, operand 0, single buffered']
    #allocation3 [shape = 's32[1]{0}', space=sflag, size = 0x4, scoped, tag = 'scoped memory for tpu_custom_call.1']
    #allocation4 [shape = 's32[1]{0}', space=sflag, size = 0x4, scoped, tag = 'scoped memory for tpu_custom_call.1']
    #allocation5 [shape = 'u8[512]{0}', space=vmem, size = 0x400, scoped, tag = 'input window, operand 1, single buffered']
    #allocation6 [shape = 's32[1]{0}', space=sflag, size = 0x4, scoped, tag = 'scoped memory for tpu_custom_call.1']
    #allocation7 [shape = 'u8[2048]{0}', space=vmem, size = 0x800, scoped, tag = 'output window, operand 0, single buffered']
    %8 = vsyncpa [#allocation3], 0
    %9 = vsyncpa [#allocation6], 0
    %10 = vsyncpa [#allocation4], 0
    // Predicated region
    $region2: #{tpu_custom_call.1} parent=1 // pred_check
      _
    $region3: #{tpu_custom_call.1} parent=1 // pred_check_branch
      %12 = sbr.rel (0) target = $region5
    $region4: #{tpu_custom_call.1} parent=1 // pred_region
      %14 = vsyncadd [#allocation3], 0
      %s15 = sshll.u32 %s0, 4
      %s16 = int_to_ptr.hbm [resolvable:$true] %s15
      %s17 = sshll.u32 [#allocation2], 4
      %s18 = int_to_ptr.vmem [resolvable:$true] %s17
      %23 = dma.hbm_to_vmem [thread:$0]  %s16, 512, %s18, [#allocation3], 128, 128, 8
    $region5: #{tpu_custom_call.1} parent=1 // pred_fallthru
      _
    // Predicated region
    $region6: #{tpu_custom_call.1} parent=1 // pred_check
      _
    $region7: #{tpu_custom_call.1} parent=1 // pred_check_branch
      %25 = sbr.rel (0) target = $region9
    $region8: #{tpu_custom_call.1} parent=1 // pred_region
      %27 = vsyncadd [#allocation6], 0
      %s29 = sshll.u32 %s1, 4
      %s30 = int_to_ptr.hbm [resolvable:$true] %s29
      %s31 = sshll.u32 [#allocation5], 4
      %s32 = int_to_ptr.vmem [resolvable:$true] %s31
      %34 = dma.hbm_to_vmem [thread:$0]  %s30, 16, %s32, [#allocation6]
    $region9: #{tpu_custom_call.1} parent=1 // pred_fallthru
      _
    // Predicated region
    $region10: #{tpu_custom_call.1} parent=1 // pred_check
      _
    $region11: #{tpu_custom_call.1} parent=1 // pred_check_branch
      %36 = sbr.rel (0) target = $region13
    $region12: #{tpu_custom_call.1} parent=1 // pred_region
      _
    $region13: #{tpu_custom_call.1} parent=1 // pred_fallthru
      _
    // Predicated region
    $region14: #{tpu_custom_call.1} parent=1 // pred_check
      _
    $region15: #{tpu_custom_call.1} parent=1 // pred_check_branch
      %38 = sbr.rel (0) target = $region17
    $region16: #{tpu_custom_call.1} parent=1 // pred_region
      %40 = dma.done [#allocation3], 512
    $region17: #{tpu_custom_call.1} parent=1 // pred_fallthru
      _
    // Predicated region
    $region18: #{tpu_custom_call.1} parent=1 // pred_check
      _
    $region19: #{tpu_custom_call.1} parent=1 // pred_check_branch
      %42 = sbr.rel (0) target = $region21
    $region20: #{tpu_custom_call.1} parent=1 // pred_region
      %44 = dma.done [#allocation6], 16
    $region21: #{tpu_custom_call.1} parent=1 // pred_fallthru
      _
    %v45 = vld [vmem:[#allocation2] sm:$0xff]
    %v46 = vld [vmem:[#allocation2 + $0x8] sm:$0xff]
    %v47 = vld [vmem:[#allocation2 + $0x10] sm:$0xff]
    %v48 = vld [vmem:[#allocation2 + $0x18] sm:$0xff]
    %vm49 = vcmask 392192
    %v50 = vsel %vm49, %v45, 0.0
    %51 = vadd.xlane.f32.xlu0 %v50
    %v52 = vpop.xlane.xlu0 %51
    %v53 = vsel %vm49, %v46, 0.0
    %54 = vadd.xlane.f32.xlu0 %v53
    %v55 = vpop.xlane.xlu0 %54
    %v56 = vsel %vm49, %v47, 0.0
    %57 = vadd.xlane.f32.xlu0 %v56
    %v58 = vpop.xlane.xlu0 %57
    %v59 = vsel %vm49, %v48, 0.0
    %60 = vadd.xlane.f32.xlu0 %v59
    %v61 = vpop.xlane.xlu0 %60
    %v62 = vmul.f32 %v52, 0.020833334
    %v63 = vmul.f32 %v55, 0.020833334
    %v64 = vmul.f32 %v58, 0.020833334
    %v65 = vmul.f32 %v61, 0.020833334
    %v66 = vsub.f32 %v45, %v62
    %v67 = vsub.f32 %v46, %v63
    %v68 = vsub.f32 %v47, %v64
    %v69 = vsub.f32 %v48, %v65
    %v70 = vmul.f32 %v66, %v66
    %v71 = vmul.f32 %v67, %v67
    %v72 = vmul.f32 %v68, %v68
    %v73 = vmul.f32 %v69, %v69
    %v74 = vsel %vm49, %v70, 0.0
    %75 = vadd.xlane.f32.xlu0 %v74
    %v76 = vpop.xlane.xlu0 %75
    %v77 = vsel %vm49, %v71, 0.0
    %78 = vadd.xlane.f32.xlu0 %v77
    %v79 = vpop.xlane.xlu0 %78
    %v80 = vsel %vm49, %v72, 0.0
    %81 = vadd.xlane.f32.xlu0 %v80
    %v82 = vpop.xlane.xlu0 %81
    %v83 = vsel %vm49, %v73, 0.0
    %84 = vadd.xlane.f32.xlu0 %v83
    %v85 = vpop.xlane.xlu0 %84
    %v86 = vmul.f32 %v76, 0.020833334
    %v87 = vmul.f32 %v79, 0.020833334
    %v88 = vmul.f32 %v82, 0.020833334
    %v89 = vmul.f32 %v85, 0.020833334
    %v90 = vadd.f32 %v86, 1e-05
    %v91 = vadd.f32 %v87, 1e-05
    %v92 = vadd.f32 %v88, 1e-05
    %v93 = vadd.f32 %v89, 1e-05
    %v94 = vrsqrt.pop %v90
    %v95 = vmul.f32 %v94, %v90
    %v96 = vmul.f32 %v95, %v94
    %v97 = vmul.f32 0.5, %v96
    %v98 = vsub.f32 1.5, %v97
    %v99 = vmul.f32 %v94, %v98
    %vm100 = vweird.f32 %v90
    %vm101 = vweird.f32 %v94
    %vm102 = vmor %vm100, %vm101
    %v103 = vsel %vm102, %v94, %v99
    %v104 = vrsqrt.pop %v91
    %v105 = vmul.f32 %v104, %v91
    %v106 = vmul.f32 %v105, %v104
    %v107 = vmul.f32 0.5, %v106
    %v108 = vsub.f32 1.5, %v107
    %v109 = vmul.f32 %v104, %v108
    %vm110 = vweird.f32 %v91
    %vm111 = vweird.f32 %v104
    %vm112 = vmor %vm110, %vm111
    %v113 = vsel %vm112, %v104, %v109
    %v114 = vrsqrt.pop %v92
    %v115 = vmul.f32 %v114, %v92
    %v116 = vmul.f32 %v115, %v114
    %v117 = vmul.f32 0.5, %v116
    %v118 = vsub.f32 1.5, %v117
    %v119 = vmul.f32 %v114, %v118
    %vm120 = vweird.f32 %v92
    %vm121 = vweird.f32 %v114
    %vm122 = vmor %vm120, %vm121
    %v123 = vsel %vm122, %v114, %v119
    %v124 = vrsqrt.pop %v93
    %v125 = vmul.f32 %v124, %v93
    %v126 = vmul.f32 %v125, %v124
    %v127 = vmul.f32 0.5, %v126
    %v128 = vsub.f32 1.5, %v127
    %v129 = vmul.f32 %v124, %v128
    %vm130 = vweird.f32 %v93
    %vm131 = vweird.f32 %v124
    %vm132 = vmor %vm130, %vm131
    %v133 = vsel %vm132, %v124, %v129
    %v134 = vmul.f32 %v66, %v103
    %v135 = vmul.f32 %v67, %v113
    %v136 = vmul.f32 %v68, %v123
    %v137 = vmul.f32 %v69, %v133
    %v138 = vsel %vm49, %v134, 0.0
    %v139 = vrot.slane %v138, 4
    %v140 = vadd.f32 %v138, %v139
    %v141 = vrot.slane %v140, 2
    %v142 = vadd.f32 %v140, %v141
    %v143 = vrot.slane %v142, 1
    %v144 = vadd.f32 %v142, %v143
    %v145 = vsel %vm49, %v135, 0.0
    %v146 = vrot.slane %v145, 4
    %v147 = vadd.f32 %v145, %v146
    %v148 = vrot.slane %v147, 2
    %v149 = vadd.f32 %v147, %v148
    %v150 = vrot.slane %v149, 1
    %v151 = vadd.f32 %v149, %v150
    %v152 = vsel %vm49, %v136, 0.0
    %v153 = vrot.slane %v152, 4
    %v154 = vadd.f32 %v152, %v153
    %v155 = vrot.slane %v154, 2
    %v156 = vadd.f32 %v154, %v155
    %v157 = vrot.slane %v156, 1
    %v158 = vadd.f32 %v156, %v157
    %v159 = vsel %vm49, %v137, 0.0
    %v160 = vrot.slane %v159, 4
    %v161 = vadd.f32 %v159, %v160
    %v162 = vrot.slane %v161, 2
    %v163 = vadd.f32 %v161, %v162
    %v164 = vrot.slane %v163, 1
    %v165 = vadd.f32 %v163, %v164
    %v166 = vrcp.pop 8.0
    %v167 = vmul.f32 8.0, %v166
    %v168 = vsub.f32 1.0, %v167
    %v169 = vmul.f32 %v166, %v168
    %v170 = vadd.f32 %v166, %v169
    %vm171 = vweird.f32 %v166
    %v172 = vsel %vm171, %v166, %v170
    %v173 = vmul.f32 %v144, %v172
    %v174 = vmul.f32 %v151, %v172
    %v175 = vmul.f32 %v158, %v172
    %v176 = vmul.f32 %v165, %v172
    %v177 = vld [vmem:[#allocation5] sm:$0x1]
    %v179 = vperm.slane %v177, 0
    %v181 = vmul.f32 %v173, %v179
    %v182 = vmul.f32 %v174, %v179
    %v183 = vmul.f32 %v175, %v179
    %v184 = vmul.f32 %v176, %v179
    %v185 = vld [vmem:[%s2] sm:$0x1]
    %v187 = vperm.slane %v185, 0
    %v189 = vadd.f32 %v181, %v187
    %v190 = vadd.f32 %v182, %v187
    %v191 = vadd.f32 %v183, %v187
    %v192 = vadd.f32 %v184, %v187
    %v197 = vrot.slane %v190, 7
    %vm198 = vcmask 1041409
    %v199 = vsel %vm198, %v197, %v189
    %v200 = vrot.slane %v191, 6
    %vm201 = vcmask 1042434
    %v202 = vsel %vm201, %v200, %v199
    %v203 = vrot.slane %v192, 5
    %vm204 = vcmask 1043459
    %v205 = vsel %vm204, %v203, %v202
    %vm207 = vcmask 388096
    %208 = vst.msk [vmem:[#allocation7] sm:$0xf] %vm207, %v205
    // Predicated region
    $region22: #{tpu_custom_call.1} parent=1 // pred_check
      _
    $region23: #{tpu_custom_call.1} parent=1 // pred_check_branch
      %210 = sbr.rel (0) target = $region25
    $region24: #{tpu_custom_call.1} parent=1 // pred_region
      %212 = vsyncadd [#allocation4], 0
      %s214 = sshll.u32 [#allocation7], 4
      %s215 = int_to_ptr.vmem [resolvable:$true] %s214
      %s216 = sshll.u32 %s3, 4
      %s217 = int_to_ptr.hbm [resolvable:$true] %s216
      %219 = dma.vmem_to_hbm [thread:$0]  %s215, 64, %s217, [#allocation4]
    $region25: #{tpu_custom_call.1} parent=1 // pred_fallthru
      _
    // Predicated region
    $region26: #{tpu_custom_call.1} parent=1 // pred_check
      _
    $region27: #{tpu_custom_call.1} parent=1 // pred_check_branch
      %221 = sbr.rel (0) target = $region29
    $region28: #{tpu_custom_call.1} parent=1 // pred_region
      %223 = dma.done [#allocation4], 64
    $region29: #{tpu_custom_call.1} parent=1 // pred_fallthru
      _
    %224 = vsyncpa [#allocation3], 1
    %225 = vsyncpa [#allocation6], 1
    %226 = vsyncpa [#allocation4], 1

</llo_original>
